<compile_context>
chip_gen: v6e
topology: v6e:2x2x1
jax: 0.10.0
libtpu: 0.0.40
codegen_flags: <defaults>
</compile_context>

<pallas_src>
import jax
import jax.numpy as jnp
from jax.experimental import pallas as pl
from jax.experimental.pallas import tpu as pltpu


def _round_up(x, m):
    return (x + m - 1) // m * m


def _mlp_kernel(x_ref, w1_ref, b1_ref, w2_ref, b2_ref, w3_ref, b3_ref, o_ref):
    """Fused 3-layer MLP, ReLU after every layer; one row-tile per grid step.

    MXU operand dtype is driven by the weight dtype (pre-cast in the wrapper);
    accumulation, bias-add and ReLU are fp32.
    """
    wdt = w1_ref.dtype
    x = x_ref[...].astype(wdt)
    h = jnp.dot(x, w1_ref[...], preferred_element_type=jnp.float32)
    h = jnp.maximum(h + b1_ref[...], 0.0)
    h = jnp.dot(h.astype(wdt), w2_ref[...], preferred_element_type=jnp.float32)
    h = jnp.maximum(h + b2_ref[...], 0.0)
    y = jnp.dot(h.astype(wdt), w3_ref[...], preferred_element_type=jnp.float32)
    y = jnp.maximum(y + b3_ref[...], 0.0)
    o_ref[...] = y.astype(o_ref.dtype)


def _const_spec(shape):
    """Full-array, grid-invariant block; single-buffered (no unused 2nd buf)."""
    idx = lambda i: (0,) * len(shape)
    try:
        return pl.BlockSpec(shape, idx, pipeline_mode=pl.Buffered(1))
    except TypeError:  # older jax without pipeline_mode kwarg
        return pl.BlockSpec(shape, idx)


def _vmem_capacity_bytes():
    try:
        return int(pltpu.get_tpu_info().vmem_capacity_bytes)
    except Exception:
        return 64 * 1024 * 1024  # conservative (v7x per-TensorCore)


def relational_encoder_forward(x, params, *, row_tile=512, use_bf16=False,
                               out_dtype=None):
    """x: [B, N, D]. params: w1,b1,w2,b2,w3,b3 with weights laid out [in, out]
    and biases [out] or [1, out] (transpose PyTorch nn.Linear weights)."""
    B, N, D = x.shape
    w1, w2, w3 = params["w1"], params["w2"], params["w3"]
    b1 = jnp.asarray(params["b1"]).reshape(1, -1)
    b2 = jnp.asarray(params["b2"]).reshape(1, -1)
    b3 = jnp.asarray(params["b3"]).reshape(1, -1)
    H = w1.shape[1]
    M = w3.shape[1]
    assert w1.shape == (D, H), "w1 must be [D, H] (PyTorch weight transposed)"
    assert w2.shape == (H, H) and w3.shape == (H, M)
    assert M == D, "module reshapes output back to [B, N, D]; needs output_dim == input_dim"

    out_dtype = x.dtype if out_dtype is None else out_dtype
    wdtype = jnp.bfloat16 if use_bf16 else w1.dtype
    # Pre-cast weights once (outside the grid loop); biases stay fp32.
    w1c, w2c, w3c = (w.astype(wdtype) for w in (w1, w2, w3))
    b1c, b2c, b3c = (b.astype(jnp.float32) for b in (b1, b2, b3))

    rows = B * N
    x2d = x.reshape(rows, D)

    # ---- row tiling: big tiles, but guarantee >=2 grid steps when possible
    # (so ("parallel",) spans both v7x TensorCores).  Multiple of 8.
    rt = min(_round_up(row_tile, 8), _round_up(rows, 8))
    if rows >= 16:
        rt = min(rt, _round_up(-(-rows // 2), 8))
    rt = max(8, rt)
    num_tiles = pl.cdiv(rows, rt)

    # ---- honest cost / VMEM accounting (true dims, single weight buffer) ----
    xbytes = jnp.dtype(x.dtype).itemsize
    obytes = jnp.dtype(out_dtype).itemsize
    wbytes = jnp.dtype(wdtype).itemsize
    weight_hbm_bytes = (D * H + H * H + H * M) * wbytes + (2 * H + M) * 4
    flops = 2 * rows * (D * H + H * H + H * M)
    bytes_accessed = rows * D * xbytes + rows * M * obytes + weight_hbm_bytes

    act_tile_bytes = 2 * rt * D * xbytes + 2 * rt * M * obytes      # dbl-buffered x / out
    interm_bytes = rt * H * (4 + wbytes) + rt * M * 4                # fp32 h + bf16 copy + y
    need = act_tile_bytes + weight_hbm_bytes + interm_bytes
    vmem_cap = int(0.85 * _vmem_capacity_bytes())                    # leave compiler headroom
    vmem_limit = int(min(vmem_cap, max(16 * 1024 * 1024, int(1.5 * need) + (4 << 20))))

    out2d = pl.pallas_call(
        _mlp_kernel,
        out_shape=jax.ShapeDtypeStruct((rows, M), out_dtype),
        grid_spec=pl.GridSpec(
            grid=(num_tiles,),
            in_specs=[
                pl.BlockSpec((rt, D), lambda i: (i, 0)),   # x row-tile
                _const_spec((D, H)),                        # w1 (resident, 1 buffer)
                _const_spec((1, H)),                        # b1
                _const_spec((H, H)),                        # w2
                _const_spec((1, H)),                        # b2
                _const_spec((H, M)),                        # w3
                _const_spec((1, M)),                        # b3
            ],
            out_specs=pl.BlockSpec((rt, M), lambda i: (i, 0)),
        ),
        compiler_params=pltpu.CompilerParams(
            dimension_semantics=("parallel",),
            vmem_limit_bytes=vmem_limit,
        ),
        cost_estimate=pl.CostEstimate(
            flops=flops, transcendentals=0, bytes_accessed=bytes_accessed),
    )(x2d, w1c, b1c, w2c, b2c, w3c, b3c)

    return out2d.reshape(B, N, M)


def init_params(key, input_dim, output_dim, hidden_dim, dtype=jnp.float32):
    """Deterministic init mimicking torch.nn.Linear default (U[-1/sqrt(fan_in), +]).
    Weights are stored [in, out] (transposed vs. PyTorch), biases [1, out]."""
    ks = jax.random.split(key, 6)

    def lin(kw, kb, fan_in, fan_out):
        bound = 1.0 / jnp.sqrt(jnp.array(fan_in, dtype))
        w = jax.random.uniform(kw, (fan_in, fan_out), dtype, -bound, bound)
        b = jax.random.uniform(kb, (1, fan_out), dtype, -bound, bound)
        return w, b

    w1, b1 = lin(ks[0], ks[1], input_dim, hidden_dim)
    w2, b2 = lin(ks[2], ks[3], hidden_dim, hidden_dim)
    w3, b3 = lin(ks[4], ks[5], hidden_dim, output_dim)
    return {"w1": w1, "b1": b1, "w2": w2, "b2": b2, "w3": w3, "b3": b3}


def _reference(x, p, use_bf16=False):
    """Pure-JAX reference. With use_bf16=True, dot operands are bf16 (fp32 accum)
    to mirror the kernel's MXU dtype so comparisons are apples-to-apples."""
    B, N, D = x.shape
    cast = (lambda a: a.astype(jnp.bfloat16)) if use_bf16 else (lambda a: a)
    h = x.reshape(B * N, D)
    h = jnp.maximum(jnp.dot(cast(h), cast(p["w1"]),
                            preferred_element_type=jnp.float32) + p["b1"], 0.0)
    h = jnp.maximum(jnp.dot(cast(h), cast(p["w2"]),
                            preferred_element_type=jnp.float32) + p["b2"], 0.0)
    h = jnp.maximum(jnp.dot(cast(h), cast(p["w3"]),
                            preferred_element_type=jnp.float32) + p["b3"], 0.0)
    return h.reshape(B, N, -1)


if __name__ == "__main__":
    # Relation encoder: x is [B, N, N] and the module reshapes output back to
    # [B, N, D], so input_dim == output_dim == N.
    B, N = 2, 64
    input_dim = N
    hidden_dim = 32
    output_dim = input_dim

    key = jax.random.PRNGKey(0)
    kx, kp = jax.random.split(key)
    x = jax.random.normal(kx, (B, N, input_dim), dtype=jnp.float32)
    params = init_params(kp, input_dim, output_dim, hidden_dim)

    # Default path: fp32 everywhere -> matches the PyTorch module's numerics.
    out_f32 = jax.block_until_ready(relational_encoder_forward(x, params))
    ref_f32 = _reference(x, params, use_bf16=False)
    assert out_f32.shape == (B, N, output_dim), out_f32.shape
    assert jnp.allclose(out_f32, ref_f32, atol=1e-5, rtol=1e-5), "fp32 mismatch vs reference"

    # Opt-in fast path: bf16 MXU operands (weights pre-cast once), fp32 accum.
    out_bf16 = jax.block_until_ready(
        relational_encoder_forward(x, params, use_bf16=True))
    ref_bf16 = _reference(x, params, use_bf16=True)
    assert out_bf16.shape == (B, N, output_dim), out_bf16.shape
    assert jnp.allclose(out_bf16, ref_bf16, atol=5e-3, rtol=5e-3), "bf16 mismatch vs reference"

    print("KERNEL_OK")
</pallas_src>

<mosaic_0001>
module attributes {stable_mosaic.version = 11 : i64} {
  func.func @_mlp_kernel(%arg0: i32, %arg1: memref<64x64xf32, #tpu.memory_space<vmem>>, %arg2: memref<64x32xf32, #tpu.memory_space<vmem>>, %arg3: memref<1x32xf32, #tpu.memory_space<vmem>>, %arg4: memref<32x32xf32, #tpu.memory_space<vmem>>, %arg5: memref<1x32xf32, #tpu.memory_space<vmem>>, %arg6: memref<32x64xf32, #tpu.memory_space<vmem>>, %arg7: memref<1x64xf32, #tpu.memory_space<vmem>>, %arg8: memref<64x64xf32, #tpu.memory_space<vmem>>) attributes {dimension_semantics = [#tpu.dimension_semantics<parallel>], iteration_bounds = array<i64: 2>, scalar_prefetch = 0 : i64, scratch_operands = 0 : i64, tpu.core_type = #tpu.core_type<tc>, window_params = [{transform_indices = @transform_0, window_bounds = array<i64: 64, 64>}, {pipeline_mode = #tpu.pipeline_mode<synchronous>, transform_indices = @transform_1, window_bounds = array<i64: 64, 32>}, {pipeline_mode = #tpu.pipeline_mode<synchronous>, transform_indices = @transform_2, window_bounds = array<i64: 1, 32>}, {pipeline_mode = #tpu.pipeline_mode<synchronous>, transform_indices = @transform_3, window_bounds = array<i64: 32, 32>}, {pipeline_mode = #tpu.pipeline_mode<synchronous>, transform_indices = @transform_4, window_bounds = array<i64: 1, 32>}, {pipeline_mode = #tpu.pipeline_mode<synchronous>, transform_indices = @transform_5, window_bounds = array<i64: 32, 64>}, {pipeline_mode = #tpu.pipeline_mode<synchronous>, transform_indices = @transform_6, window_bounds = array<i64: 1, 64>}, {transform_indices = @transform_7, window_bounds = array<i64: 64, 64>}]} {
    %c0 = arith.constant 0 : index
    %c0_0 = arith.constant 0 : index
    %0 = vector.load %arg1[%c0, %c0_0] : memref<64x64xf32, #tpu.memory_space<vmem>>, vector<64x64xf32>
    %c0_1 = arith.constant 0 : index
    %c0_2 = arith.constant 0 : index
    %1 = vector.load %arg2[%c0_1, %c0_2] : memref<64x32xf32, #tpu.memory_space<vmem>>, vector<64x32xf32>
    %cst = arith.constant dense<0.000000e+00> : vector<64x32xf32>
    %2 = tpu.matmul %0, %1, %cst {dimension_numbers = #tpu.dot_dimension_numbers<[1], [0], [0], [1], [0, 0, 1, 1], [], []>} : vector<64x64xf32>, vector<64x32xf32>, vector<64x32xf32> -> vector<64x32xf32>
    %c0_3 = arith.constant 0 : index
    %c0_4 = arith.constant 0 : index
    %3 = vector.load %arg3[%c0_3, %c0_4] : memref<1x32xf32, #tpu.memory_space<vmem>>, vector<1x32xf32>
    %4 = vector.broadcast %3 : vector<1x32xf32> to vector<64x32xf32>
    %5 = arith.addf %2, %4 : vector<64x32xf32>
    %cst_5 = arith.constant 0.000000e+00 : f32
    %6 = vector.broadcast %cst_5 : f32 to vector<64x32xf32>
    %7 = arith.maximumf %5, %6 : vector<64x32xf32>
    %c0_6 = arith.constant 0 : index
    %c0_7 = arith.constant 0 : index
    %8 = vector.load %arg4[%c0_6, %c0_7] : memref<32x32xf32, #tpu.memory_space<vmem>>, vector<32x32xf32>
    %cst_8 = arith.constant dense<0.000000e+00> : vector<64x32xf32>
    %9 = tpu.matmul %7, %8, %cst_8 {dimension_numbers = #tpu.dot_dimension_numbers<[1], [0], [0], [1], [0, 0, 1, 1], [], []>} : vector<64x32xf32>, vector<32x32xf32>, vector<64x32xf32> -> vector<64x32xf32>
    %c0_9 = arith.constant 0 : index
    %c0_10 = arith.constant 0 : index
    %10 = vector.load %arg5[%c0_9, %c0_10] : memref<1x32xf32, #tpu.memory_space<vmem>>, vector<1x32xf32>
    %11 = vector.broadcast %10 : vector<1x32xf32> to vector<64x32xf32>
    %12 = arith.addf %9, %11 : vector<64x32xf32>
    %cst_11 = arith.constant 0.000000e+00 : f32
    %13 = vector.broadcast %cst_11 : f32 to vector<64x32xf32>
    %14 = arith.maximumf %12, %13 : vector<64x32xf32>
    %c0_12 = arith.constant 0 : index
    %c0_13 = arith.constant 0 : index
    %15 = vector.load %arg6[%c0_12, %c0_13] : memref<32x64xf32, #tpu.memory_space<vmem>>, vector<32x64xf32>
    %cst_14 = arith.constant dense<0.000000e+00> : vector<64x64xf32>
    %16 = tpu.matmul %14, %15, %cst_14 {dimension_numbers = #tpu.dot_dimension_numbers<[1], [0], [0], [1], [0, 0, 1, 1], [], []>} : vector<64x32xf32>, vector<32x64xf32>, vector<64x64xf32> -> vector<64x64xf32>
    %c0_15 = arith.constant 0 : index
    %c0_16 = arith.constant 0 : index
    %17 = vector.load %arg7[%c0_15, %c0_16] : memref<1x64xf32, #tpu.memory_space<vmem>>, vector<1x64xf32>
    %18 = vector.broadcast %17 : vector<1x64xf32> to vector<64x64xf32>
    %19 = arith.addf %16, %18 : vector<64x64xf32>
    %cst_17 = arith.constant 0.000000e+00 : f32
    %20 = vector.broadcast %cst_17 : f32 to vector<64x64xf32>
    %21 = arith.maximumf %19, %20 : vector<64x64xf32>
    %c0_18 = arith.constant 0 : index
    %c0_19 = arith.constant 0 : index
    %22 = vector.load %arg8[%c0_18, %c0_19] : memref<64x64xf32, #tpu.memory_space<vmem>>, vector<64x64xf32>
    tpu.vector_store %arg8[%c0_18, %c0_19], %21 {strides = array<i32>} : memref<64x64xf32, #tpu.memory_space<vmem>>, vector<64x64xf32>,
    return
  }
  func.func @transform_0(%arg0: i32) -> (i32, i32) {
    %c0_i32 = arith.constant 0 : i32
    %c0_i32_0 = arith.constant 0 : i32
    return %arg0, %c0_i32 : i32, i32
  }
  func.func @transform_1(%arg0: i32) -> (i32, i32) {
    %c0_i32 = arith.constant 0 : i32
    %c0_i32_0 = arith.constant 0 : i32
    %c0_i32_1 = arith.constant 0 : i32
    return %c0_i32, %c0_i32_0 : i32, i32
  }
  func.func @transform_2(%arg0: i32) -> (i32, i32) {
    %c0_i32 = arith.constant 0 : i32
    %c0_i32_0 = arith.constant 0 : i32
    %c0_i32_1 = arith.constant 0 : i32
    return %c0_i32, %c0_i32_0 : i32, i32
  }
  func.func @transform_3(%arg0: i32) -> (i32, i32) {
    %c0_i32 = arith.constant 0 : i32
    %c0_i32_0 = arith.constant 0 : i32
    %c0_i32_1 = arith.constant 0 : i32
    return %c0_i32, %c0_i32_0 : i32, i32
  }
  func.func @transform_4(%arg0: i32) -> (i32, i32) {
    %c0_i32 = arith.constant 0 : i32
    %c0_i32_0 = arith.constant 0 : i32
    %c0_i32_1 = arith.constant 0 : i32
    return %c0_i32, %c0_i32_0 : i32, i32
  }
  func.func @transform_5(%arg0: i32) -> (i32, i32) {
    %c0_i32 = arith.constant 0 : i32
    %c0_i32_0 = arith.constant 0 : i32
    %c0_i32_1 = arith.constant 0 : i32
    return %c0_i32, %c0_i32_0 : i32, i32
  }
  func.func @transform_6(%arg0: i32) -> (i32, i32) {
    %c0_i32 = arith.constant 0 : i32
    %c0_i32_0 = arith.constant 0 : i32
    %c0_i32_1 = arith.constant 0 : i32
    return %c0_i32, %c0_i32_0 : i32, i32
  }
  func.func @transform_7(%arg0: i32) -> (i32, i32) {
    %c0_i32 = arith.constant 0 : i32
    %c0_i32_0 = arith.constant 0 : i32
    return %arg0, %c0_i32 : i32, i32
  }
}

</mosaic_0001>

<llo_original>
// kernel: tpu_custom_call.1
$region0: #{tpu_custom_call.1}
  #allocation0 [shape = 'u32[]', space=smem, size = 0x4, offset = 0x4, fixed_abs, tag = 'smem constant byte address 0x4 - core index']
  #allocation1 [shape = 'u32[144,128]{1,0:T(1,128)}', space=vmem, size = 0x12000, scoped, tag = 'internal scratch']
  %s0 = inlined_call_operand.vmem [shape: f32[128,64], index: 0, kind: input, shape index: {}]
  %s1 = inlined_call_operand.vmem [shape: f32[64,32], index: 1, kind: input, shape index: {}]
  %s2 = inlined_call_operand.vmem [shape: f32[1,32], index: 2, kind: input, shape index: {}]
  %s3 = inlined_call_operand.vmem [shape: f32[32,32], index: 3, kind: input, shape index: {}]
  %s4 = inlined_call_operand.vmem [shape: f32[1,32], index: 4, kind: input, shape index: {}]
  %s5 = inlined_call_operand.vmem [shape: f32[32,64], index: 5, kind: input, shape index: {}]
  %s6 = inlined_call_operand.vmem [shape: f32[1,64], index: 6, kind: input, shape index: {}]
  %s7 = inlined_call_operand.vmem [shape: f32[128,64], index: 7, kind: output, shape index: {}]
  %s8 = sld [smem:[#allocation0]]
  $region61: #{tpu_custom_call.1} parent=0
    _
  %s10 = ssub.s32 1, %s8
  %s11 = scalar_select 0, %s10, %s8
  loop: start=0, step=1, limit=4
  $region2: #{tpu_custom_call.1} parent=0 // loop_pre_header
    _
  $region3: #{tpu_custom_call.1} parent=0 // loop_header
    %s13 = sphi 0, %s17
    %p14 = scmp.ge.s32.totalorder %s13, 4
    %s23 = sphi 0, %s25
    %s26 = sphi 0, %s23
    %s27 = sphi 0, %s26
    %s43 = sphi 0, %s27
    %s47 = sphi 0, %s47
    %s49 = sphi 0, %s47
    %s50 = sphi 0, %s49
    %s64 = sphi 0, %s50
    %s68 = sphi 0, %s68
    %s70 = sphi 0, %s68
    %s71 = sphi 0, %s70
    %s85 = sphi 0, %s71
    %s89 = sphi 0, %s89
    %s91 = sphi 0, %s89
    %s92 = sphi 0, %s91
    %s106 = sphi 0, %s92
    %s110 = sphi 0, %s110
    %s112 = sphi 0, %s110
    %s113 = sphi 0, %s112
    %s127 = sphi 0, %s113
    %s131 = sphi 0, %s131
    %s133 = sphi 0, %s131
    %s134 = sphi 0, %s133
    %s148 = sphi 0, %s134
    %s152 = sphi 0, %s152
    %s154 = sphi 0, %s152
    %s155 = sphi 0, %s154
    %s169 = sphi 0, %s155
    %s175 = sphi 0, %s177
    %s178 = sphi 0, %s175
    %s179 = sphi 0, %s178
    %s195 = sphi 0, %s179
  $region4: #{tpu_custom_call.1} parent=0 // loop_header_branch
    %16 = sbr.rel (%p14) target = $region8
  $region5: #{tpu_custom_call.1} parent=0 // loop_body
    %s18 = ssub.s32 %s13, 1
    %s19 = ssub.s32 %s13, 2
    %s20 = sadd.s32 %s13, 1
    %s21 = ssub.s32 %s13, %s20
    %p22 = scmp.eq.s32.totalorder %s21, 0
    %s24 = sadd.s32 %s23, 1
    %s25 = scalar_select %p22, %s23, %s24
    %p28 = pneg %p22
    %p29 = scmp.eq.s32.totalorder %s13, 1
    %p30 = por %p28, %p29
    %p31 = scmp.ne.s32.totalorder %s23, %s26
    %p32 = scmp.eq.s32.totalorder %s13, 0
    %p33 = por %p31, %p32
    %p34 = scmp.ne.s32.totalorder %s23, %s26
    %p35 = scmp.eq.s32.totalorder %s18, 1
    %p36 = por %p34, %p35
    %p37 = scmp.ne.s32.totalorder %s26, %s27
    %p38 = scmp.eq.s32.totalorder %s18, 0
    %p39 = por %p37, %p38
    %p40 = scmp.ne.s32.totalorder %s26, %s27
    %p41 = scmp.eq.s32.totalorder %s19, 1
    %p42 = por %p40, %p41
    %p44 = scmp.ne.s32.totalorder %s27, %s43
    %p45 = scmp.eq.s32.totalorder %s19, 0
    %p46 = por %p44, %p45
    %s48 = sadd.s32 %s47, 1
    %p51 = scmp.eq.s32.totalorder %s13, 1
    %p52 = scmp.ne.s32.totalorder %s47, %s49
    %p53 = scmp.eq.s32.totalorder %s13, 0
    %p54 = por %p52, %p53
    %p55 = scmp.ne.s32.totalorder %s47, %s49
    %p56 = scmp.eq.s32.totalorder %s18, 1
    %p57 = por %p55, %p56
    %p58 = scmp.ne.s32.totalorder %s49, %s50
    %p59 = scmp.eq.s32.totalorder %s18, 0
    %p60 = por %p58, %p59
    %p61 = scmp.ne.s32.totalorder %s49, %s50
    %p62 = scmp.eq.s32.totalorder %s19, 1
    %p63 = por %p61, %p62
    %p65 = scmp.ne.s32.totalorder %s50, %s64
    %p66 = scmp.eq.s32.totalorder %s19, 0
    %p67 = por %p65, %p66
    %s69 = sadd.s32 %s68, 1
    %p72 = scmp.eq.s32.totalorder %s13, 1
    %p73 = scmp.ne.s32.totalorder %s68, %s70
    %p74 = scmp.eq.s32.totalorder %s13, 0
    %p75 = por %p73, %p74
    %p76 = scmp.ne.s32.totalorder %s68, %s70
    %p77 = scmp.eq.s32.totalorder %s18, 1
    %p78 = por %p76, %p77
    %p79 = scmp.ne.s32.totalorder %s70, %s71
    %p80 = scmp.eq.s32.totalorder %s18, 0
    %p81 = por %p79, %p80
    %p82 = scmp.ne.s32.totalorder %s70, %s71
    %p83 = scmp.eq.s32.totalorder %s19, 1
    %p84 = por %p82, %p83
    %p86 = scmp.ne.s32.totalorder %s71, %s85
    %p87 = scmp.eq.s32.totalorder %s19, 0
    %p88 = por %p86, %p87
    %s90 = sadd.s32 %s89, 1
    %p93 = scmp.eq.s32.totalorder %s13, 1
    %p94 = scmp.ne.s32.totalorder %s89, %s91
    %p95 = scmp.eq.s32.totalorder %s13, 0
    %p96 = por %p94, %p95
    %p97 = scmp.ne.s32.totalorder %s89, %s91
    %p98 = scmp.eq.s32.totalorder %s18, 1
    %p99 = por %p97, %p98
    %p100 = scmp.ne.s32.totalorder %s91, %s92
    %p101 = scmp.eq.s32.totalorder %s18, 0
    %p102 = por %p100, %p101
    %p103 = scmp.ne.s32.totalorder %s91, %s92
    %p104 = scmp.eq.s32.totalorder %s19, 1
    %p105 = por %p103, %p104
    %p107 = scmp.ne.s32.totalorder %s92, %s106
    %p108 = scmp.eq.s32.totalorder %s19, 0
    %p109 = por %p107, %p108
    %s111 = sadd.s32 %s110, 1
    %p114 = scmp.eq.s32.totalorder %s13, 1
    %p115 = scmp.ne.s32.totalorder %s110, %s112
    %p116 = scmp.eq.s32.totalorder %s13, 0
    %p117 = por %p115, %p116
    %p118 = scmp.ne.s32.totalorder %s110, %s112
    %p119 = scmp.eq.s32.totalorder %s18, 1
    %p120 = por %p118, %p119
    %p121 = scmp.ne.s32.totalorder %s112, %s113
    %p122 = scmp.eq.s32.totalorder %s18, 0
    %p123 = por %p121, %p122
    %p124 = scmp.ne.s32.totalorder %s112, %s113
    %p125 = scmp.eq.s32.totalorder %s19, 1
    %p126 = por %p124, %p125
    %p128 = scmp.ne.s32.totalorder %s113, %s127
    %p129 = scmp.eq.s32.totalorder %s19, 0
    %p130 = por %p128, %p129
    %s132 = sadd.s32 %s131, 1
    %p135 = scmp.eq.s32.totalorder %s13, 1
    %p136 = scmp.ne.s32.totalorder %s131, %s133
    %p137 = scmp.eq.s32.totalorder %s13, 0
    %p138 = por %p136, %p137
    %p139 = scmp.ne.s32.totalorder %s131, %s133
    %p140 = scmp.eq.s32.totalorder %s18, 1
    %p141 = por %p139, %p140
    %p142 = scmp.ne.s32.totalorder %s133, %s134
    %p143 = scmp.eq.s32.totalorder %s18, 0
    %p144 = por %p142, %p143
    %p145 = scmp.ne.s32.totalorder %s133, %s134
    %p146 = scmp.eq.s32.totalorder %s19, 1
    %p147 = por %p145, %p146
    %p149 = scmp.ne.s32.totalorder %s134, %s148
    %p150 = scmp.eq.s32.totalorder %s19, 0
    %p151 = por %p149, %p150
    %s153 = sadd.s32 %s152, 1
    %p156 = scmp.eq.s32.totalorder %s13, 1
    %p157 = scmp.ne.s32.totalorder %s152, %s154
    %p158 = scmp.eq.s32.totalorder %s13, 0
    %p159 = por %p157, %p158
    %p160 = scmp.ne.s32.totalorder %s152, %s154
    %p161 = scmp.eq.s32.totalorder %s18, 1
    %p162 = por %p160, %p161
    %p163 = scmp.ne.s32.totalorder %s154, %s155
    %p164 = scmp.eq.s32.totalorder %s18, 0
    %p165 = por %p163, %p164
    %p166 = scmp.ne.s32.totalorder %s154, %s155
    %p167 = scmp.eq.s32.totalorder %s19, 1
    %p168 = por %p166, %p167
    %p170 = scmp.ne.s32.totalorder %s155, %s169
    %p171 = scmp.eq.s32.totalorder %s19, 0
    %p172 = por %p170, %p171
    %s173 = ssub.s32 %s13, %s20
    %p174 = scmp.eq.s32.totalorder %s173, 0
    %s176 = sadd.s32 %s175, 1
    %s177 = scalar_select %p174, %s175, %s176
    %p180 = pneg %p174
    %p181 = scmp.eq.s32.totalorder %s13, 1
    %p182 = por %p180, %p181
    %p183 = scmp.ne.s32.totalorder %s175, %s178
    %p184 = scmp.eq.s32.totalorder %s13, 0
    %p185 = por %p183, %p184
    %p186 = scmp.ne.s32.totalorder %s175, %s178
    %p187 = scmp.eq.s32.totalorder %s18, 1
    %p188 = por %p186, %p187
    %p189 = scmp.ne.s32.totalorder %s178, %s179
    %p190 = scmp.eq.s32.totalorder %s18, 0
    %p191 = por %p189, %p190
    %p192 = scmp.ne.s32.totalorder %s178, %s179
    %p193 = scmp.eq.s32.totalorder %s19, 1
    %p194 = por %p192, %p193
    %p196 = scmp.ne.s32.totalorder %s179, %s195
    %p197 = scmp.eq.s32.totalorder %s19, 0
    %p198 = por %p196, %p197
    %p199 = scmp.le.s32.totalorder 1, %s13
    %p200 = scmp.lt.s32.totalorder %s13, 3
    %p201 = pnand %p199, %p200
    %p202 = pneg %p201
    // Predicated region
    $region9: #{tpu_custom_call.1} parent=5 // pred_check
      _
    $region10: #{tpu_custom_call.1} parent=5 // pred_check_branch
      %204 = sbr.rel (%p201) target = $region12
    $region11: #{tpu_custom_call.1} parent=5 // pred_region
      %s205 = ssub.s32 %s13, 1
      // Predicated region
      $region13: #{tpu_custom_call.1} parent=11 // pred_check
        %p206 = pneg %p60
      $region14: #{tpu_custom_call.1} parent=11 // pred_check_branch
        %208 = sbr.rel (%p206) target = $region16
      $region15: #{tpu_custom_call.1} parent=11 // pred_region
        _
      $region16: #{tpu_custom_call.1} parent=11 // pred_fallthru
        _
      // Predicated region
      $region17: #{tpu_custom_call.1} parent=11 // pred_check
        %p209 = pneg %p81
      $region18: #{tpu_custom_call.1} parent=11 // pred_check_branch
        %211 = sbr.rel (%p209) target = $region20
      $region19: #{tpu_custom_call.1} parent=11 // pred_region
        _
      $region20: #{tpu_custom_call.1} parent=11 // pred_fallthru
        _
      // Predicated region
      $region21: #{tpu_custom_call.1} parent=11 // pred_check
        %p212 = pneg %p102
      $region22: #{tpu_custom_call.1} parent=11 // pred_check_branch
        %214 = sbr.rel (%p212) target = $region24
      $region23: #{tpu_custom_call.1} parent=11 // pred_region
        _
      $region24: #{tpu_custom_call.1} parent=11 // pred_fallthru
        _
      // Predicated region
      $region25: #{tpu_custom_call.1} parent=11 // pred_check
        %p215 = pneg %p123
      $region26: #{tpu_custom_call.1} parent=11 // pred_check_branch
        %217 = sbr.rel (%p215) target = $region28
      $region27: #{tpu_custom_call.1} parent=11 // pred_region
        _
      $region28: #{tpu_custom_call.1} parent=11 // pred_fallthru
        _
      // Predicated region
      $region29: #{tpu_custom_call.1} parent=11 // pred_check
        %p218 = pneg %p144
      $region30: #{tpu_custom_call.1} parent=11 // pred_check_branch
        %220 = sbr.rel (%p218) target = $region32
      $region31: #{tpu_custom_call.1} parent=11 // pred_region
        _
      $region32: #{tpu_custom_call.1} parent=11 // pred_fallthru
        _
      // Predicated region
      $region33: #{tpu_custom_call.1} parent=11 // pred_check
        %p221 = pneg %p165
      $region34: #{tpu_custom_call.1} parent=11 // pred_check_branch
        %223 = sbr.rel (%p221) target = $region36
      $region35: #{tpu_custom_call.1} parent=11 // pred_region
        _
      $region36: #{tpu_custom_call.1} parent=11 // pred_fallthru
        _
    $region12: #{tpu_custom_call.1} parent=5 // pred_fallthru
      _
    %p224 = scmp.lt.s32.totalorder %s13, 2
    // Predicated region
    $region37: #{tpu_custom_call.1} parent=5 // pred_check
      %p225 = pneg %p224
    $region38: #{tpu_custom_call.1} parent=5 // pred_check_branch
      %227 = sbr.rel (%p225) target = $region40
    $region39: #{tpu_custom_call.1} parent=5 // pred_region
      // Predicated region
      $region41: #{tpu_custom_call.1} parent=39 // pred_check
        %p228 = pneg %p33
      $region42: #{tpu_custom_call.1} parent=39 // pred_check_branch
        %230 = sbr.rel (%p228) target = $region44
      $region43: #{tpu_custom_call.1} parent=39 // pred_region
        %s231 = smul.u32 8, %s13
        %p232 = scmp.lt.s32.totalorder %s231, 15
        %s233 = scalar_select %p232, %s231, 15
        %s234 = smul.addr %s233, 8
        %s235 = scalar_lea.vmem %s0, %s234
        %s236 = smul.u32 8, %s13
      $region44: #{tpu_custom_call.1} parent=39 // pred_fallthru
        _
    $region40: #{tpu_custom_call.1} parent=5 // pred_fallthru
      _
    %p237 = scmp.le.s32.totalorder 1, %s13
    %p238 = scmp.lt.s32.totalorder %s13, 3
    %p239 = pnand %p237, %p238
    %p240 = pneg %p239
    // Predicated region
    $region45: #{tpu_custom_call.1} parent=5 // pred_check
      _
    $region46: #{tpu_custom_call.1} parent=5 // pred_check_branch
      %242 = sbr.rel (%p239) target = $region48
    $region47: #{tpu_custom_call.1} parent=5 // pred_region
      %s243 = ssub.s32 %s13, 1
      %s244 = smul.u32 8, %s18
      %p245 = scmp.lt.s32.totalorder %s244, 15
      %s246 = scalar_select %p245, %s244, 15
      %s247 = smul.addr %s246, 8
      %s248 = scalar_lea.vmem %s0, %s247
      %p249 = pneg %p39
      %p250 = pneg %p36
      %p251 = pneg %p60
      %p252 = pneg %p57
      %p253 = pneg %p81
      %p254 = pneg %p78
      %p255 = pneg %p102
      %p256 = pneg %p99
      %p257 = pneg %p123
      %p258 = pneg %p120
      %p259 = pneg %p144
      %p260 = pneg %p141
      %p261 = pneg %p165
      %p262 = pneg %p162
      %p263 = pneg %p191
      %p264 = pneg %p188
      %s265 = smul.u32 8, %s18
      %p266 = scmp.lt.s32.totalorder %s265, 15
      %s267 = scalar_select %p266, %s265, 15
      %s268 = smul.addr %s267, 8
      %s269 = scalar_lea.vmem %s7, %s268
      %s270 = smul.u32 8, %s18
      %p271 = scmp.lt.s32.totalorder %s270, 15
      %s272 = scalar_select %p271, %s270, 15
      %s273 = smul.addr %s272, 8
      %s274 = scalar_lea.vmem %s0, %s273
      %s275 = smul.u32 8, %s18
      %s276 = smul.u32 8, %s18
      %p277 = scmp.lt.s32.totalorder %s276, 15
      %s278 = scalar_select %p277, %s276, 15
      %s279 = smul.addr %s278, 8
      %s280 = scalar_lea.vmem %s7, %s279
      %s281 = smul.u32 8, %s18
      %v282 = vld [vmem:[%s274] sm:$0xff]
      %v283 = vld [vmem:[%s274 + $0x8] sm:$0xff]
      %v284 = vld [vmem:[%s274 + $0x10] sm:$0xff]
      %v285 = vld [vmem:[%s274 + $0x18] sm:$0xff]
      %v286 = vld [vmem:[%s274 + $0x20] sm:$0xff]
      %v287 = vld [vmem:[%s274 + $0x28] sm:$0xff]
      %v288 = vld [vmem:[%s274 + $0x30] sm:$0xff]
      %v289 = vld [vmem:[%s274 + $0x38] sm:$0xff]
      %v290 = vld [vmem:[%s1] sm:$0xff]
      %v291 = vld [vmem:[%s1 + $0x8] sm:$0xff]
      %v292 = vld [vmem:[%s1 + $0x10] sm:$0xff]
      %v293 = vld [vmem:[%s1 + $0x18] sm:$0xff]
      %v294 = vld [vmem:[%s1 + $0x20] sm:$0xff]
      %v295 = vld [vmem:[%s1 + $0x28] sm:$0xff]
      %v296 = vld [vmem:[%s1 + $0x30] sm:$0xff]
      %v297 = vld [vmem:[%s1 + $0x38] sm:$0xff]
      %v298 = vld [vmem:[%s2] sm:$0x1]
      %v300 = vlaneseq
      %v301 = vshrl.u32 %v300, 7
      %v302 = vsub.s32 0, %v301
      %v303 = vrot.slane %v298, %v302
      %vm305 = vcmask 523264
      %v307 = vsel %vm305, %v282, 0
      %v310 = vsel %vm305, %v283, 0
      %v313 = vsel %vm305, %v284, 0
      %v316 = vsel %vm305, %v285, 0
      %v319 = vsel %vm305, %v286, 0
      %v322 = vsel %vm305, %v287, 0
      %v325 = vsel %vm305, %v288, 0
      %v328 = vsel %vm305, %v289, 0
      %330 = vmatprep.subr.mxu0 0.0
      %331 = vmatpush1.msra.mxu0 0.0
      %332 = vmatprep.subr.mxu0 0.0
      %333 = vmatpush1.msra.mxu0 0.0
      %334 = vmatprep.subr.mxu0 0.0
      %335 = vmatpush1.msra.mxu0 0.0
      %336 = vmatprep.subr.mxu0 0.0
      %337 = vmatpush1.msra.mxu0 0.0
      %338 = vmatprep.subr.mxu0 0.0
      %339 = vmatpush1.msra.mxu0 0.0
      %340 = vmatprep.subr.mxu0 0.0
      %341 = vmatpush1.msra.mxu0 0.0
      %342 = vmatprep.subr.mxu0 0.0
      %343 = vmatpush1.msra.mxu0 0.0
      %344 = vmatprep.subr.mxu0 0.0
      %345 = vmatpush1.msra.mxu0 0.0
      %346 = vmatprep.subr.mxu0 0.0
      %347 = vmatpush1.msra.mxu0 %v297
      %348 = vmatprep.subr.mxu0 0.0
      %349 = vmatpush1.msra.mxu0 %v296
      %350 = vmatprep.subr.mxu0 0.0
      %351 = vmatpush1.msra.mxu0 %v295
      %352 = vmatprep.subr.mxu0 0.0
      %353 = vmatpush1.msra.mxu0 %v294
      %354 = vmatprep.subr.mxu0 0.0
      %355 = vmatpush1.msra.mxu0 %v293
      %356 = vmatprep.subr.mxu0 0.0
      %357 = vmatpush1.msra.mxu0 %v292
      %358 = vmatprep.subr.mxu0 0.0
      %359 = vmatpush1.msra.mxu0 %v291
      %360 = vmatprep.subr.mxu0 0.0
      %361 = vmatpush1.msra.mxu0 %v290
      %362 = vmatprep.subr.mxu0 0.0
      %363 = vmatpush2.msra.mxu0 0.0
      %364 = vmatprep.subr.mxu0 0.0
      %365 = vmatpush2.msra.mxu0 0.0
      %366 = vmatprep.subr.mxu0 0.0
      %367 = vmatpush2.msra.mxu0 0.0
      %368 = vmatprep.subr.mxu0 0.0
      %369 = vmatpush2.msra.mxu0 0.0
      %370 = vmatprep.subr.mxu0 0.0
      %371 = vmatpush2.msra.mxu0 0.0
      %372 = vmatprep.subr.mxu0 0.0
      %373 = vmatpush2.msra.mxu0 0.0
      %374 = vmatprep.subr.mxu0 0.0
      %375 = vmatpush2.msra.mxu0 0.0
      %376 = vmatprep.subr.mxu0 0.0
      %377 = vmatpush2.msra.mxu0 0.0
      %378 = vmatprep.subr.mxu0 0.0
      %379 = vmatpush2.msra.mxu0 0.0
      %380 = vmatprep.subr.mxu0 0.0
      %381 = vmatpush2.msra.mxu0 0.0
      %382 = vmatprep.subr.mxu0 0.0
      %383 = vmatpush2.msra.mxu0 0.0
      %384 = vmatprep.subr.mxu0 0.0
      %385 = vmatpush2.msra.mxu0 0.0
      %386 = vmatprep.subr.mxu0 0.0
      %387 = vmatpush2.msra.mxu0 0.0
      %388 = vmatprep.subr.mxu0 0.0
      %389 = vmatpush2.msra.mxu0 0.0
      %390 = vmatprep.subr.mxu0 0.0
      %391 = vmatpush2.msra.mxu0 0.0
      %392 = vmatprep.subr.mxu0 0.0
      %393 = vmatpush2.msra.mxu0 0.0
      %394 = vmatprep.mubr.f32.mxu0 0.0
      %395 = vmatmul.mubr.f32.gmra.mxu0 %v307
      %v396 = vpop.f32.mrf.mxu0
      %v397 = vadd.f32 %v303, %v396
      %v398 = vpop.f32.mrf.mxu0
      %399 = vmatprep.mubr.f32.mxu0 0.0
      %400 = vmatmul.mubr.f32.gmra.mxu0 %v310
      %v401 = vpop.f32.mrf.mxu0
      %v402 = vadd.f32 %v303, %v401
      %v403 = vpop.f32.mrf.mxu0
      %404 = vmatprep.mubr.f32.mxu0 0.0
      %405 = vmatmul.mubr.f32.gmra.mxu0 %v313
      %v406 = vpop.f32.mrf.mxu0
      %v407 = vadd.f32 %v303, %v406
      %v408 = vpop.f32.mrf.mxu0
      %409 = vmatprep.mubr.f32.mxu0 0.0
      %410 = vmatmul.mubr.f32.gmra.mxu0 %v316
      %v411 = vpop.f32.mrf.mxu0
      %v412 = vadd.f32 %v303, %v411
      %v413 = vpop.f32.mrf.mxu0
      %414 = vmatprep.mubr.f32.mxu0 0.0
      %415 = vmatmul.mubr.f32.gmra.mxu0 %v319
      %v416 = vpop.f32.mrf.mxu0
      %v417 = vadd.f32 %v303, %v416
      %v418 = vpop.f32.mrf.mxu0
      %419 = vmatprep.mubr.f32.mxu0 0.0
      %420 = vmatmul.mubr.f32.gmra.mxu0 %v322
      %v421 = vpop.f32.mrf.mxu0
      %v422 = vadd.f32 %v303, %v421
      %v423 = vpop.f32.mrf.mxu0
      %424 = vmatprep.mubr.f32.mxu0 0.0
      %425 = vmatmul.mubr.f32.gmra.mxu0 %v325
      %v426 = vpop.f32.mrf.mxu0
      %v427 = vadd.f32 %v303, %v426
      %v428 = vpop.f32.mrf.mxu0
      %429 = vmatprep.mubr.f32.mxu0 0.0
      %430 = vmatmul.mubr.f32.gmra.mxu0 %v328
      %v431 = vpop.f32.mrf.mxu0
      %v432 = vadd.f32 %v303, %v431
      %v433 = vpop.f32.mrf.mxu0
      %434 = vdwg.mxu0
      %v435 = vmax.f32 %v397, 0.0
      %v436 = vmax.f32 %v402, 0.0
      %v437 = vmax.f32 %v407, 0.0
      %v438 = vmax.f32 %v412, 0.0
      %v439 = vmax.f32 %v417, 0.0
      %v440 = vmax.f32 %v422, 0.0
      %v441 = vmax.f32 %v427, 0.0
      %v442 = vmax.f32 %v432, 0.0
      %v443 = vld [vmem:[%s3] sm:$0xff]
      %v444 = vld [vmem:[%s3 + $0x8] sm:$0xff]
      %v445 = vld [vmem:[%s3 + $0x10] sm:$0xff]
      %v446 = vld [vmem:[%s3 + $0x18] sm:$0xff]
      %v447 = vld [vmem:[%s4] sm:$0x1]
      %v449 = vlaneseq
      %v450 = vshrl.u32 %v449, 7
      %v451 = vsub.s32 0, %v450
      %v452 = vrot.slane %v447, %v451
      %vm454 = vcmask 261120
      %v456 = vsel %vm454, %v435, 0
      %v459 = vsel %vm454, %v436, 0
      %v462 = vsel %vm454, %v437, 0
      %v465 = vsel %vm454, %v438, 0
      %v468 = vsel %vm454, %v439, 0
      %v471 = vsel %vm454, %v440, 0
      %v474 = vsel %vm454, %v441, 0
      %v477 = vsel %vm454, %v442, 0
      %479 = vmatprep.subr.mxu0 0.0
      %480 = vmatpush1.msra.mxu0 0.0
      %481 = vmatprep.subr.mxu0 0.0
      %482 = vmatpush1.msra.mxu0 0.0
      %483 = vmatprep.subr.mxu0 0.0
      %484 = vmatpush1.msra.mxu0 0.0
      %485 = vmatprep.subr.mxu0 0.0
      %486 = vmatpush1.msra.mxu0 0.0
      %487 = vmatprep.subr.mxu0 0.0
      %488 = vmatpush1.msra.mxu0 0.0
      %489 = vmatprep.subr.mxu0 0.0
      %490 = vmatpush1.msra.mxu0 0.0
      %491 = vmatprep.subr.mxu0 0.0
      %492 = vmatpush1.msra.mxu0 0.0
      %493 = vmatprep.subr.mxu0 0.0
      %494 = vmatpush1.msra.mxu0 0.0
      %495 = vmatprep.subr.mxu0 0.0
      %496 = vmatpush1.msra.mxu0 0.0
      %497 = vmatprep.subr.mxu0 0.0
      %498 = vmatpush1.msra.mxu0 0.0
      %499 = vmatprep.subr.mxu0 0.0
      %500 = vmatpush1.msra.mxu0 0.0
      %501 = vmatprep.subr.mxu0 0.0
      %502 = vmatpush1.msra.mxu0 0.0
      %503 = vmatprep.subr.mxu0 0.0
      %504 = vmatpush1.msra.mxu0 %v446
      %505 = vmatprep.subr.mxu0 0.0
      %506 = vmatpush1.msra.mxu0 %v445
      %507 = vmatprep.subr.mxu0 0.0
      %508 = vmatpush1.msra.mxu0 %v444
      %509 = vmatprep.subr.mxu0 0.0
      %510 = vmatpush1.msra.mxu0 %v443
      %511 = vmatprep.subr.mxu0 0.0
      %512 = vmatpush2.msra.mxu0 0.0
      %513 = vmatprep.subr.mxu0 0.0
      %514 = vmatpush2.msra.mxu0 0.0
      %515 = vmatprep.subr.mxu0 0.0
      %516 = vmatpush2.msra.mxu0 0.0
      %517 = vmatprep.subr.mxu0 0.0
      %518 = vmatpush2.msra.mxu0 0.0
      %519 = vmatprep.subr.mxu0 0.0
      %520 = vmatpush2.msra.mxu0 0.0
      %521 = vmatprep.subr.mxu0 0.0
      %522 = vmatpush2.msra.mxu0 0.0
      %523 = vmatprep.subr.mxu0 0.0
      %524 = vmatpush2.msra.mxu0 0.0
      %525 = vmatprep.subr.mxu0 0.0
      %526 = vmatpush2.msra.mxu0 0.0
      %527 = vmatprep.subr.mxu0 0.0
      %528 = vmatpush2.msra.mxu0 0.0
      %529 = vmatprep.subr.mxu0 0.0
      %530 = vmatpush2.msra.mxu0 0.0
      %531 = vmatprep.subr.mxu0 0.0
      %532 = vmatpush2.msra.mxu0 0.0
      %533 = vmatprep.subr.mxu0 0.0
      %534 = vmatpush2.msra.mxu0 0.0
      %535 = vmatprep.subr.mxu0 0.0
      %536 = vmatpush2.msra.mxu0 0.0
      %537 = vmatprep.subr.mxu0 0.0
      %538 = vmatpush2.msra.mxu0 0.0
      %539 = vmatprep.subr.mxu0 0.0
      %540 = vmatpush2.msra.mxu0 0.0
      %541 = vmatprep.subr.mxu0 0.0
      %542 = vmatpush2.msra.mxu0 0.0
      %543 = vmatprep.mubr.f32.mxu0 0.0
      %544 = vmatmul.mubr.f32.gmra.mxu0 %v456
      %v545 = vpop.f32.mrf.mxu0
      %v546 = vadd.f32 %v452, %v545
      %v547 = vpop.f32.mrf.mxu0
      %548 = vmatprep.mubr.f32.mxu0 0.0
      %549 = vmatmul.mubr.f32.gmra.mxu0 %v459
      %v550 = vpop.f32.mrf.mxu0
      %v551 = vadd.f32 %v452, %v550
      %v552 = vpop.f32.mrf.mxu0
      %553 = vmatprep.mubr.f32.mxu0 0.0
      %554 = vmatmul.mubr.f32.gmra.mxu0 %v462
      %v555 = vpop.f32.mrf.mxu0
      %v556 = vadd.f32 %v452, %v555
      %v557 = vpop.f32.mrf.mxu0
      %558 = vmatprep.mubr.f32.mxu0 0.0
      %559 = vmatmul.mubr.f32.gmra.mxu0 %v465
      %v560 = vpop.f32.mrf.mxu0
      %v561 = vadd.f32 %v452, %v560
      %v562 = vpop.f32.mrf.mxu0
      %563 = vmatprep.mubr.f32.mxu0 0.0
      %564 = vmatmul.mubr.f32.gmra.mxu0 %v468
      %v565 = vpop.f32.mrf.mxu0
      %v566 = vadd.f32 %v452, %v565
      %v567 = vpop.f32.mrf.mxu0
      %568 = vmatprep.mubr.f32.mxu0 0.0
      %569 = vmatmul.mubr.f32.gmra.mxu0 %v471
      %v570 = vpop.f32.mrf.mxu0
      %v571 = vadd.f32 %v452, %v570
      %v572 = vpop.f32.mrf.mxu0
      %573 = vmatprep.mubr.f32.mxu0 0.0
      %574 = vmatmul.mubr.f32.gmra.mxu0 %v474
      %v575 = vpop.f32.mrf.mxu0
      %v576 = vadd.f32 %v452, %v575
      %v577 = vpop.f32.mrf.mxu0
      %578 = vmatprep.mubr.f32.mxu0 0.0
      %579 = vmatmul.mubr.f32.gmra.mxu0 %v477
      %v580 = vpop.f32.mrf.mxu0
      %v581 = vadd.f32 %v452, %v580
      %v582 = vpop.f32.mrf.mxu0
      %583 = vdwg.mxu0
      %v584 = vmax.f32 %v546, 0.0
      %v585 = vmax.f32 %v551, 0.0
      %v586 = vmax.f32 %v556, 0.0
      %v587 = vmax.f32 %v561, 0.0
      %v588 = vmax.f32 %v566, 0.0
      %v589 = vmax.f32 %v571, 0.0
      %v590 = vmax.f32 %v576, 0.0
      %v591 = vmax.f32 %v581, 0.0
      %v592 = vld [vmem:[%s5] sm:$0xff]
      %v593 = vld [vmem:[%s5 + $0x8] sm:$0xff]
      %v594 = vld [vmem:[%s5 + $0x10] sm:$0xff]
      %v595 = vld [vmem:[%s5 + $0x18] sm:$0xff]
      %v596 = vld [vmem:[%s6] sm:$0x1]
      %v598 = vlaneseq
      %v599 = vshrl.u32 %v598, 7
      %v600 = vsub.s32 0, %v599
      %v601 = vrot.slane %v596, %v600
      %v604 = vsel %vm454, %v584, 0
      %v607 = vsel %vm454, %v585, 0
      %v610 = vsel %vm454, %v586, 0
      %v613 = vsel %vm454, %v587, 0
      %v616 = vsel %vm454, %v588, 0
      %v619 = vsel %vm454, %v589, 0
      %v622 = vsel %vm454, %v590, 0
      %v625 = vsel %vm454, %v591, 0
      %627 = vmatprep.subr.mxu0 0.0
      %628 = vmatpush1.msra.mxu0 0.0
      %629 = vmatprep.subr.mxu0 0.0
      %630 = vmatpush1.msra.mxu0 0.0
      %631 = vmatprep.subr.mxu0 0.0
      %632 = vmatpush1.msra.mxu0 0.0
      %633 = vmatprep.subr.mxu0 0.0
      %634 = vmatpush1.msra.mxu0 0.0
      %635 = vmatprep.subr.mxu0 0.0
      %636 = vmatpush1.msra.mxu0 0.0
      %637 = vmatprep.subr.mxu0 0.0
      %638 = vmatpush1.msra.mxu0 0.0
      %639 = vmatprep.subr.mxu0 0.0
      %640 = vmatpush1.msra.mxu0 0.0
      %641 = vmatprep.subr.mxu0 0.0
      %642 = vmatpush1.msra.mxu0 0.0
      %643 = vmatprep.subr.mxu0 0.0
      %644 = vmatpush1.msra.mxu0 0.0
      %645 = vmatprep.subr.mxu0 0.0
      %646 = vmatpush1.msra.mxu0 0.0
      %647 = vmatprep.subr.mxu0 0.0
      %648 = vmatpush1.msra.mxu0 0.0
      %649 = vmatprep.subr.mxu0 0.0
      %650 = vmatpush1.msra.mxu0 0.0
      %651 = vmatprep.subr.mxu0 0.0
      %652 = vmatpush1.msra.mxu0 %v595
      %653 = vmatprep.subr.mxu0 0.0
      %654 = vmatpush1.msra.mxu0 %v594
      %655 = vmatprep.subr.mxu0 0.0
      %656 = vmatpush1.msra.mxu0 %v593
      %657 = vmatprep.subr.mxu0 0.0
      %658 = vmatpush1.msra.mxu0 %v592
      %659 = vmatprep.subr.mxu0 0.0
      %660 = vmatpush2.msra.mxu0 0.0
      %661 = vmatprep.subr.mxu0 0.0
      %662 = vmatpush2.msra.mxu0 0.0
      %663 = vmatprep.subr.mxu0 0.0
      %664 = vmatpush2.msra.mxu0 0.0
      %665 = vmatprep.subr.mxu0 0.0
      %666 = vmatpush2.msra.mxu0 0.0
      %667 = vmatprep.subr.mxu0 0.0
      %668 = vmatpush2.msra.mxu0 0.0
      %669 = vmatprep.subr.mxu0 0.0
      %670 = vmatpush2.msra.mxu0 0.0
      %671 = vmatprep.subr.mxu0 0.0
      %672 = vmatpush2.msra.mxu0 0.0
      %673 = vmatprep.subr.mxu0 0.0
      %674 = vmatpush2.msra.mxu0 0.0
      %675 = vmatprep.subr.mxu0 0.0
      %676 = vmatpush2.msra.mxu0 0.0
      %677 = vmatprep.subr.mxu0 0.0
      %678 = vmatpush2.msra.mxu0 0.0
      %679 = vmatprep.subr.mxu0 0.0
      %680 = vmatpush2.msra.mxu0 0.0
      %681 = vmatprep.subr.mxu0 0.0
      %682 = vmatpush2.msra.mxu0 0.0
      %683 = vmatprep.subr.mxu0 0.0
      %684 = vmatpush2.msra.mxu0 0.0
      %685 = vmatprep.subr.mxu0 0.0
      %686 = vmatpush2.msra.mxu0 0.0
      %687 = vmatprep.subr.mxu0 0.0
      %688 = vmatpush2.msra.mxu0 0.0
      %689 = vmatprep.subr.mxu0 0.0
      %690 = vmatpush2.msra.mxu0 0.0
      %691 = vmatprep.mubr.f32.mxu0 0.0
      %692 = vmatmul.mubr.f32.gmra.mxu0 %v604
      %v693 = vpop.f32.mrf.mxu0
      %v694 = vadd.f32 %v601, %v693
      %v695 = vpop.f32.mrf.mxu0
      %696 = vmatprep.mubr.f32.mxu0 0.0
      %697 = vmatmul.mubr.f32.gmra.mxu0 %v607
      %v698 = vpop.f32.mrf.mxu0
      %v699 = vadd.f32 %v601, %v698
      %v700 = vpop.f32.mrf.mxu0
      %701 = vmatprep.mubr.f32.mxu0 0.0
      %702 = vmatmul.mubr.f32.gmra.mxu0 %v610
      %v703 = vpop.f32.mrf.mxu0
      %v704 = vadd.f32 %v601, %v703
      %v705 = vpop.f32.mrf.mxu0
      %706 = vmatprep.mubr.f32.mxu0 0.0
      %707 = vmatmul.mubr.f32.gmra.mxu0 %v613
      %v708 = vpop.f32.mrf.mxu0
      %v709 = vadd.f32 %v601, %v708
      %v710 = vpop.f32.mrf.mxu0
      %711 = vmatprep.mubr.f32.mxu0 0.0
      %712 = vmatmul.mubr.f32.gmra.mxu0 %v616
      %v713 = vpop.f32.mrf.mxu0
      %v714 = vadd.f32 %v601, %v713
      %v715 = vpop.f32.mrf.mxu0
      %716 = vmatprep.mubr.f32.mxu0 0.0
      %717 = vmatmul.mubr.f32.gmra.mxu0 %v619
      %v718 = vpop.f32.mrf.mxu0
      %v719 = vadd.f32 %v601, %v718
      %v720 = vpop.f32.mrf.mxu0
      %721 = vmatprep.mubr.f32.mxu0 0.0
      %722 = vmatmul.mubr.f32.gmra.mxu0 %v622
      %v723 = vpop.f32.mrf.mxu0
      %v724 = vadd.f32 %v601, %v723
      %v725 = vpop.f32.mrf.mxu0
      %726 = vmatprep.mubr.f32.mxu0 0.0
      %727 = vmatmul.mubr.f32.gmra.mxu0 %v625
      %v728 = vpop.f32.mrf.mxu0
      %v729 = vadd.f32 %v601, %v728
      %v730 = vpop.f32.mrf.mxu0
      %731 = vdwg.mxu0
      %v732 = vmax.f32 %v694, 0.0
      %v733 = vmax.f32 %v699, 0.0
      %v734 = vmax.f32 %v704, 0.0
      %v735 = vmax.f32 %v709, 0.0
      %v736 = vmax.f32 %v714, 0.0
      %v737 = vmax.f32 %v719, 0.0
      %v738 = vmax.f32 %v724, 0.0
      %v739 = vmax.f32 %v729, 0.0
      %740 = vst.msk [vmem:[%s280] sm:$0xff] %vm305, %v732
      %741 = vst.msk [vmem:[%s280 + $0x8] sm:$0xff] %vm305, %v733
      %742 = vst.msk [vmem:[%s280 + $0x10] sm:$0xff] %vm305, %v734
      %743 = vst.msk [vmem:[%s280 + $0x18] sm:$0xff] %vm305, %v735
      %744 = vst.msk [vmem:[%s280 + $0x20] sm:$0xff] %vm305, %v736
      %745 = vst.msk [vmem:[%s280 + $0x28] sm:$0xff] %vm305, %v737
      %746 = vst.msk [vmem:[%s280 + $0x30] sm:$0xff] %vm305, %v738
      %747 = vst.msk [vmem:[%s280 + $0x38] sm:$0xff] %vm305, %v739
      %s748 = smul.u32 8, %s18
      %p749 = scmp.lt.s32.totalorder %s748, 15
      %s750 = scalar_select %p749, %s748, 15
      %s751 = smul.addr %s750, 8
      %s752 = scalar_lea.vmem %s7, %s751
      // Predicated region
      $region49: #{tpu_custom_call.1} parent=47 // pred_check
        %p753 = pneg %p188
      $region50: #{tpu_custom_call.1} parent=47 // pred_check_branch
        %755 = sbr.rel (%p753) target = $region52
      $region51: #{tpu_custom_call.1} parent=47 // pred_region
        %s756 = smul.u32 8, %s18
      $region52: #{tpu_custom_call.1} parent=47 // pred_fallthru
        _
    $region48: #{tpu_custom_call.1} parent=5 // pred_fallthru
      _
    %p757 = scmp.le.s32.totalorder 2, %s13
    // Predicated region
    $region53: #{tpu_custom_call.1} parent=5 // pred_check
      %p758 = pneg %p757
    $region54: #{tpu_custom_call.1} parent=5 // pred_check_branch
      %760 = sbr.rel (%p758) target = $region56
    $region55: #{tpu_custom_call.1} parent=5 // pred_region
      %s761 = ssub.s32 %s13, 2
      // Predicated region
      $region57: #{tpu_custom_call.1} parent=55 // pred_check
        %p762 = pneg %p194
      $region58: #{tpu_custom_call.1} parent=55 // pred_check_branch
        %764 = sbr.rel (%p762) target = $region60
      $region59: #{tpu_custom_call.1} parent=55 // pred_region
        %s765 = smul.u32 8, %s19
        %p766 = scmp.lt.s32.totalorder %s765, 15
        %s767 = scalar_select %p766, %s765, 15
        %s768 = smul.addr %s767, 8
        %s769 = scalar_lea.vmem %s7, %s768
      $region60: #{tpu_custom_call.1} parent=55 // pred_fallthru
        _
    $region56: #{tpu_custom_call.1} parent=5 // pred_fallthru
      _
  $region6: #{tpu_custom_call.1} parent=0 // loop_footer
    %s17 = sadd.s32 1, %s13
  $region7: #{tpu_custom_call.1} parent=0 // loop_footer_branch
    %12 = sbr.rel target = $region3
  $region8: #{tpu_custom_call.1} parent=0 // loop_exit
    _

</llo_original>
